<compile_context>
chip_gen: v6e
topology: v6e:2x2x1
jax: 0.10.0
libtpu: 0.0.40
codegen_flags: <defaults>
</compile_context>

<pallas_src>
import numpy as np
import jax
import jax.numpy as jnp
from jax import lax
from jax.experimental import pallas as pl
from jax.experimental.pallas import tpu as pltpu

# ----------------------------------------------------------------------------
# Pallas tiled matmul kernels (bf16 operands, f32 accumulation, fused epilogue)
# ----------------------------------------------------------------------------
TM_CAP, TN_CAP, TK_CAP = 1024, 512, 512     # worst case ~9 MiB double-buffered
_MIN_M, _MIN_N, _MIN_K = 128, 128, 128      # below this -> XLA (tiny matmuls)
VMEM_LIMIT = 32 * 1024 * 1024               # explicit scoped-VMEM budget


def _rup(x, m):
    return ((x + m - 1) // m) * m


def _pick_tile(dim, cap, mult=128):
    """Tile size: multiple of `mult` (MXU-aligned), <= cap, minimal padding."""
    d = _rup(dim, mult)
    if d <= cap:
        return d
    best_t, best_pad = mult, None
    t = (cap // mult) * mult
    while t >= mult:
        pad = _rup(d, t) - d
        if pad == 0:
            return t                      # largest exact divisor
        if best_pad is None or pad < best_pad:
            best_t, best_pad = t, pad
        t -= mult
    return best_t


def _mm_kernel_factory(fuse_relu, with_residual):
    """2-D matmul kernel: out = act(a @ b + shift [+ residual]), f32 epilogue."""
    def _epilogue(acc, t, r):
        out = acc + t
        if r is not None:
            out = out + r.astype(jnp.float32)
        if fuse_relu:
            out = jnp.maximum(out, 0.0)
        return out

    if with_residual:
        def kernel(a_ref, b_ref, t_ref, r_ref, o_ref, acc_ref):
            @pl.when(pl.program_id(2) == 0)
            def _():
                acc_ref[...] = jnp.zeros_like(acc_ref)

            acc_ref[...] += jnp.dot(a_ref[...], b_ref[...],
                                    preferred_element_type=jnp.float32)

            @pl.when(pl.program_id(2) == pl.num_programs(2) - 1)
            def _():
                o_ref[...] = _epilogue(acc_ref[...], t_ref[...],
                                       r_ref[...]).astype(o_ref.dtype)
    else:
        def kernel(a_ref, b_ref, t_ref, o_ref, acc_ref):
            @pl.when(pl.program_id(2) == 0)
            def _():
                acc_ref[...] = jnp.zeros_like(acc_ref)

            acc_ref[...] += jnp.dot(a_ref[...], b_ref[...],
                                    preferred_element_type=jnp.float32)

            @pl.when(pl.program_id(2) == pl.num_programs(2) - 1)
            def _():
                o_ref[...] = _epilogue(acc_ref[...], t_ref[...],
                                       None).astype(o_ref.dtype)
    return kernel


_MM_KERNELS = {(r, res): _mm_kernel_factory(r, res)
               for r in (False, True) for res in (False, True)}


def pallas_matmul(a, b, shift=None, *, n=None, residual=None, relu=False,
                  out_dtype=jnp.bfloat16):
    """out = act(a @ b + shift [+ residual]).  bf16 MXU, f32 acc, fused epilogue.

    `b` / `shift` may be pre-padded to their (Kp, Np) / (1, Np) tile shapes at
    construction time (preferred), in which case `n` gives the logical N."""
    M, K = a.shape
    N = int(n) if n is not None else int(b.shape[1])

    tm = _pick_tile(M, TM_CAP, 128)
    tn = _pick_tile(N, TN_CAP, 128)
    tk = _pick_tile(K, TK_CAP, 128)
    Mp, Kp, Np = _rup(M, tm), _rup(K, tk), _rup(N, tn)
    # Guarantee >=2 blocks on a parallel axis so both v7x TensorCores get work.
    if Mp // tm == 1 and Np // tn == 1 and tm >= 32:
        tm //= 2

    a = a.astype(jnp.bfloat16)
    if (Mp, Kp) != (M, K):
        a = jnp.pad(a, ((0, Mp - M), (0, Kp - K)))

    if b.shape == (Kp, Np):                           # pre-padded weight
        bw = b.astype(jnp.bfloat16)
    else:
        assert b.shape == (K, N), (b.shape, (K, N))
        bw = b.astype(jnp.bfloat16)
        if (Kp, Np) != (K, N):
            bw = jnp.pad(bw, ((0, Kp - K), (0, Np - N)))

    if shift is None:
        t = jnp.zeros((1, Np), jnp.float32)
    elif shift.shape == (1, Np):                      # pre-padded shift
        t = shift.astype(jnp.float32)
    else:
        t = shift.reshape(1, -1).astype(jnp.float32)
        if t.shape[1] != Np:
            t = jnp.pad(t, ((0, 0), (0, Np - t.shape[1])))

    operands = [a, bw, t]
    in_specs = [
        pl.BlockSpec((tm, tk), lambda i, j, k: (i, k)),
        pl.BlockSpec((tk, tn), lambda i, j, k: (k, j)),
        pl.BlockSpec((1, tn), lambda i, j, k: (0, j)),
    ]
    with_res = residual is not None
    if with_res:
        r = residual.reshape(M, N).astype(jnp.bfloat16)
        if (Mp, Np) != (M, N):
            r = jnp.pad(r, ((0, Mp - M), (0, Np - N)))
        operands.append(r)
        in_specs.append(pl.BlockSpec((tm, tn), lambda i, j, k: (i, j)))

    out = pl.pallas_call(
        _MM_KERNELS[(bool(relu), with_res)],
        out_shape=jax.ShapeDtypeStruct((Mp, Np), out_dtype),
        grid_spec=pltpu.PrefetchScalarGridSpec(
            num_scalar_prefetch=0,
            grid=(Mp // tm, Np // tn, Kp // tk),
            in_specs=in_specs,
            out_specs=pl.BlockSpec((tm, tn), lambda i, j, k: (i, j)),
            scratch_shapes=[pltpu.VMEM((tm, tn), jnp.float32)],
        ),
        compiler_params=pltpu.CompilerParams(
            dimension_semantics=("parallel", "parallel", "arbitrary"),
            vmem_limit_bytes=VMEM_LIMIT),
        cost_estimate=pl.CostEstimate(
            flops=2 * M * N * K, transcendentals=0,
            bytes_accessed=Mp * Kp * 2 + Kp * Np * 2 + Mp * Np * 2),
    )(*operands)
    if (Mp, Np) != (M, N):
        out = out[:M, :N]
    return out


def matmul_fused(a, b, shift=None, relu=False, out_dtype=jnp.bfloat16):
    """Large matmuls -> Pallas MXU kernel, tiny/degenerate ones -> XLA."""
    M, K = a.shape
    N = b.shape[1]
    if M >= _MIN_M and N >= _MIN_N and K >= _MIN_K:
        return pallas_matmul(a, b, shift, relu=relu, out_dtype=out_dtype)
    out = jnp.dot(a.astype(jnp.float32), b.astype(jnp.float32))
    if shift is not None:
        out = out + shift
    if relu:
        out = jnp.maximum(out, 0.0)
    return out.astype(out_dtype)


def _bmm_kernel_factory(fuse_relu):
    def kernel(a_ref, b_ref, o_ref, acc_ref):
        @pl.when(pl.program_id(3) == 0)
        def _():
            acc_ref[...] = jnp.zeros_like(acc_ref)

        acc_ref[...] += jnp.dot(a_ref[0], b_ref[0],
                                preferred_element_type=jnp.float32)

        @pl.when(pl.program_id(3) == pl.num_programs(3) - 1)
        def _():
            out = acc_ref[...]
            if fuse_relu:
                out = jnp.maximum(out, 0.0)
            o_ref[0] = out.astype(o_ref.dtype)
    return kernel


_BMM_KERNELS = {r: _bmm_kernel_factory(r) for r in (False, True)}


def pallas_bmm(a, b, relu=False, out_dtype=jnp.bfloat16):
    """Batched matmul.  a: (Ba,M,K) or (M,K); b: (Bb,K,N) or (K,N).
    2-D operands are broadcast over the batch inside the index_map (no copy)."""
    a3 = a if a.ndim == 3 else a[None]
    b3 = b if b.ndim == 3 else b[None]
    Ba, M, K = a3.shape
    Bb, K2, N = b3.shape
    assert K == K2, (a.shape, b.shape)
    B = max(Ba, Bb)
    if M < _MIN_M or N < _MIN_N or K < _MIN_K:
        out = jnp.einsum(
            "bmk,bkn->bmn",
            jnp.broadcast_to(a3, (B, M, K)).astype(jnp.float32),
            jnp.broadcast_to(b3, (B, K, N)).astype(jnp.float32))
        if relu:
            out = jnp.maximum(out, 0.0)
        return out.astype(out_dtype)

    a3 = a3.astype(jnp.bfloat16)
    b3 = b3.astype(jnp.bfloat16)
    tm = _pick_tile(M, TM_CAP, 128)
    tn = _pick_tile(N, TN_CAP, 128)
    tk = _pick_tile(K, TK_CAP, 128)
    Mp, Kp, Np = _rup(M, tm), _rup(K, tk), _rup(N, tn)
    if (Mp, Kp) != (M, K):
        a3 = jnp.pad(a3, ((0, 0), (0, Mp - M), (0, Kp - K)))
    if (Kp, Np) != (K, N):
        b3 = jnp.pad(b3, ((0, 0), (0, Kp - K), (0, Np - N)))

    a_map = (lambda bb, i, j, k: (bb, i, k)) if Ba > 1 else \
            (lambda bb, i, j, k: (0, i, k))
    b_map = (lambda bb, i, j, k: (bb, k, j)) if Bb > 1 else \
            (lambda bb, i, j, k: (0, k, j))

    out = pl.pallas_call(
        _BMM_KERNELS[bool(relu)],
        out_shape=jax.ShapeDtypeStruct((B, Mp, Np), out_dtype),
        grid_spec=pltpu.PrefetchScalarGridSpec(
            num_scalar_prefetch=0,
            grid=(B, Mp // tm, Np // tn, Kp // tk),
            in_specs=[
                pl.BlockSpec((1, tm, tk), a_map),
                pl.BlockSpec((1, tk, tn), b_map),
            ],
            out_specs=pl.BlockSpec((1, tm, tn), lambda bb, i, j, k: (bb, i, j)),
            scratch_shapes=[pltpu.VMEM((tm, tn), jnp.float32)],
        ),
        compiler_params=pltpu.CompilerParams(
            dimension_semantics=("parallel", "parallel", "parallel",
                                 "arbitrary"),
            vmem_limit_bytes=VMEM_LIMIT),
        cost_estimate=pl.CostEstimate(
            flops=2 * B * M * N * K, transcendentals=0,
            bytes_accessed=Ba * Mp * Kp * 2 + Bb * Kp * Np * 2 + B * Mp * Np * 2),
    )(a3, b3)
    if (Mp, Np) != (M, N):
        out = out[:, :M, :N]
    return out


# ----------------------------------------------------------------------------
# small helpers (glue, NHWC)
# ----------------------------------------------------------------------------
def _pair(v):
    return (v, v) if isinstance(v, int) else tuple(v)


def relu(x):
    return jnp.maximum(x, 0.0)


_PRNG = [jax.random.PRNGKey(42)]  # deterministic parameter stream


def _next_key():
    _PRNG[0], k = jax.random.split(_PRNG[0])
    return k


def conv_weight(d0, d1, kh, kw):
    fan_in = d1 * kh * kw
    w = jax.random.normal(_next_key(), (d0, d1, kh, kw), jnp.float32)
    return w / np.float32(np.sqrt(fan_in))


def maxpool_3x3_s2_p1(x):
    init = jnp.array(-jnp.inf, dtype=x.dtype)
    return lax.reduce_window(x, init, lax.max,
                             (1, 3, 3, 1), (1, 2, 2, 1),
                             ((0, 0), (1, 1), (1, 1), (0, 0)))


def adaptive_avg_pool(x, out_size):
    B, H, W, C = x.shape
    assert H % out_size == 0 and W % out_size == 0
    kh, kw = H // out_size, W // out_size
    out = x.astype(jnp.float32).reshape(
        B, out_size, kh, out_size, kw, C).mean(axis=(2, 4))
    return out.astype(x.dtype)


def upsample_bilinear(x, scale=2):
    """nn.Upsample(scale_factor=scale, mode='bilinear', align_corners=True)."""
    B, H, W, C = x.shape

    def interp(arr, axis, n_in, n_out):
        if n_in == 1:
            return jnp.repeat(arr, n_out, axis=axis)
        pos = jnp.arange(n_out, dtype=jnp.float32) * (n_in - 1) / (n_out - 1)
        i0 = jnp.floor(pos).astype(jnp.int32)
        i1 = jnp.minimum(i0 + 1, n_in - 1)
        w = (pos - i0).astype(arr.dtype)
        a0 = jnp.take(arr, i0, axis=axis)
        a1 = jnp.take(arr, i1, axis=axis)
        shp = [1] * arr.ndim
        shp[axis] = n_out
        w = w.reshape(shp)
        return a0 * (1.0 - w) + a1 * w

    x = interp(x, 1, H, H * scale)
    x = interp(x, 2, W, W * scale)
    return x


# ----------------------------------------------------------------------------
# layer wrappers (parameters created deterministically at construction)
# ----------------------------------------------------------------------------
class Sequential:
    def __init__(self, mods):
        self.mods = list(mods)

    def __call__(self, x):
        for m in self.mods:
            x = m(x)
        return x


class BatchNorm2d:
    def __init__(self, c, eps=1e-5):
        self.gamma = jnp.ones((c,), jnp.float32)
        self.beta = jnp.zeros((c,), jnp.float32)
        self.mean = jnp.zeros((c,), jnp.float32)
        self.var = jnp.ones((c,), jnp.float32)
        self.eps = eps

    def affine(self):
        s = self.gamma / jnp.sqrt(self.var + self.eps)
        return s, self.beta - self.mean * s

    def __call__(self, x):          # NHWC, channel-last broadcast
        s, t = self.affine()
        return x * s + t


def _im2col(x, kh, kw, stride, padding, dilation):
    """bf16 NHWC im2col -> (B*Ho*Wo, kh*kw*C).  1x1/stride-1 is a pure reshape."""
    B, H, W, C = x.shape
    sh, sw = stride
    ph, pw = padding
    dh, dw = dilation
    Ho = (H + 2 * ph - dh * (kh - 1) - 1) // sh + 1
    Wo = (W + 2 * pw - dw * (kw - 1) - 1) // sw + 1
    if kh == 1 and kw == 1 and sh == 1 and sw == 1 and ph == 0 and pw == 0:
        return x.reshape(B * H * W, C), Ho, Wo
    xp = jnp.pad(x, ((0, 0), (ph, ph), (pw, pw), (0, 0))) if (ph or pw) else x
    cols = []
    for i in range(kh):
        for j in range(kw):
            cols.append(xp[:, i * dh: i * dh + (Ho - 1) * sh + 1: sh,
                           j * dw: j * dw + (Wo - 1) * sw + 1: sw, :])
    p = jnp.concatenate(cols, axis=-1).reshape(B * Ho * Wo, kh * kw * C)
    return p, Ho, Wo


class _ConvNHWC:
    """Conv2d (optionally with eval-mode BN folded in).  Heavy layers use the
    Pallas matmul with fused shift / residual / ReLU / bf16-out epilogue; small
    layers go straight to lax.conv_general_dilated (no im2col at all)."""

    def __init__(self, cin, cout, kernel_size, stride=1, padding=0, dilation=1,
                 bias=False, fold_bn=False):
        kh, kw = _pair(kernel_size)
        self.kh, self.kw = kh, kw
        self.stride, self.padding, self.dilation = (
            _pair(stride), _pair(padding), _pair(dilation))
        self.cin, self.cout = cin, cout

        w4 = conv_weight(cout, cin, kh, kw)                  # (O, I, kh, kw)
        if fold_bn:
            bn = BatchNorm2d(cout)
            scale, shift = bn.affine()
        else:
            scale = jnp.ones((cout,), jnp.float32)
            shift = jnp.zeros((cout,), jnp.float32)          # bias init = 0
        w4 = w4 * scale[:, None, None, None]                 # fold BN scale
        self.shift = shift

        # XLA form (no im2col): HWIO bf16
        self.w_hwio = jnp.transpose(w4, (2, 3, 1, 0)).astype(jnp.bfloat16)

        # Pallas form: (K, N) tap-major, pre-padded + pre-cast at construction
        K = kh * kw * cin
        self.K = K
        w_mat = jnp.transpose(w4, (2, 3, 1, 0)).reshape(K, cout)
        tk = _pick_tile(K, TK_CAP, 128)
        tn = _pick_tile(cout, TN_CAP, 128)
        Kp, Np = _rup(K, tk), _rup(cout, tn)
        if (Kp, Np) != (K, cout):
            w_mat = jnp.pad(w_mat, ((0, Kp - K), (0, Np - cout)))
        self.w_pad = w_mat.astype(jnp.bfloat16)
        sp = shift.reshape(1, cout)
        if Np != cout:
            sp = jnp.pad(sp, ((0, 0), (0, Np - cout)))
        self.shift_pad = sp.astype(jnp.float32)
        self.pallas_ok = (cout >= _MIN_N and K >= _MIN_K)

    def __call__(self, x, relu=False, residual=None, out_dtype=jnp.bfloat16):
        B, H, W, _ = x.shape
        kh, kw = self.kh, self.kw
        sh, sw = self.stride
        ph, pw = self.padding
        dh, dw = self.dilation
        Ho = (H + 2 * ph - dh * (kh - 1) - 1) // sh + 1
        Wo = (W + 2 * pw - dw * (kw - 1) - 1) // sw + 1
        M = B * Ho * Wo
        x = x.astype(jnp.bfloat16)

        if self.pallas_ok and M >= _MIN_M:
            p, Ho, Wo = _im2col(x, kh, kw, self.stride, self.padding,
                                self.dilation)
            out = pallas_matmul(p, self.w_pad, self.shift_pad, n=self.cout,
                                residual=residual, relu=relu,
                                out_dtype=out_dtype)
            return out.reshape(B, Ho, Wo, self.cout)

        # XLA fallback: native conv (no im2col), elementwise epilogue fused by XLA
        out = lax.conv_general_dilated(
            x, self.w_hwio, window_strides=(sh, sw),
            padding=((ph, ph), (pw, pw)), rhs_dilation=(dh, dw),
            dimension_numbers=('NHWC', 'HWIO', 'NHWC'),
            preferred_element_type=jnp.float32)
        out = out + self.shift
        if residual is not None:
            out = out + residual.astype(jnp.float32)
        if relu:
            out = jnp.maximum(out, 0.0)
        return out.astype(out_dtype)


class Conv2d(_ConvNHWC):
    def __init__(self, cin, cout, kernel_size, stride=1, padding=0, dilation=1,
                 bias=False):
        super().__init__(cin, cout, kernel_size, stride, padding, dilation,
                         bias=bias, fold_bn=False)


class BasicConv2d(_ConvNHWC):
    """Conv (no bias) + eval-mode BatchNorm (scale folded into the weights,
    shift fused into the matmul epilogue).  No ReLU unless the caller fuses it
    (matches the reference BasicConv2d.forward)."""

    def __init__(self, in_planes, out_planes, kernel_size, stride=1, padding=0,
                 dilation=1):
        super().__init__(in_planes, out_planes, kernel_size, stride, padding,
                         dilation, bias=False, fold_bn=True)


class ConvTranspose2d:
    """Lowered to lax.conv_general_dilated with lhs_dilation (no zero-stuffed
    buffer, no 4x wasted flops).  Channel counts here are small -> XLA path."""

    def __init__(self, cin, cout, kernel_size, stride, padding=0,
                 output_padding=0, bias=False):
        k = kernel_size
        w4 = conv_weight(cin, cout, k, k)                    # (I, O, k, k)
        self.w_hwio = jnp.transpose(jnp.flip(w4, axis=(2, 3)),
                                    (2, 3, 0, 1)).astype(jnp.bfloat16)
        self.k, self.stride = k, stride
        self.padding, self.output_padding = padding, output_padding
        self.shift = jnp.zeros((cout,), jnp.float32)

    def __call__(self, x, out_dtype=jnp.bfloat16):
        s, k, p, op = self.stride, self.k, self.padding, self.output_padding
        lo, hi = k - 1 - p, k - 1 - p + op
        out = lax.conv_general_dilated(
            x.astype(jnp.bfloat16), self.w_hwio, window_strides=(1, 1),
            padding=((lo, hi), (lo, hi)), lhs_dilation=(s, s),
            dimension_numbers=('NHWC', 'HWIO', 'NHWC'),
            preferred_element_type=jnp.float32)
        out = out + self.shift
        return out.astype(out_dtype)


# ----------------------------------------------------------------------------
# MaDNet sub-modules (NHWC)
# ----------------------------------------------------------------------------
class ChannelAttention:
    def __init__(self, in_planes, ratio=16):
        # matches the reference: hardcoded //16, max-pool only
        self.fc1 = Conv2d(in_planes, in_planes // 16, 1, bias=False)
        self.fc2 = Conv2d(in_planes // 16, in_planes, 1, bias=False)

    def __call__(self, x):
        m = jnp.max(x, axis=(1, 2), keepdims=True)      # AdaptiveMaxPool2d(1)
        m = self.fc2(self.fc1(m, relu=True))            # tiny M -> XLA path
        return jax.nn.sigmoid(m)


class SpatialAttention:
    def __init__(self, kernel_size=7):
        pad = 3 if kernel_size == 7 else 1
        self.conv1 = Conv2d(1, 1, kernel_size, padding=pad, bias=False)

    def __call__(self, x):
        m = jnp.max(x, axis=-1, keepdims=True)
        return jax.nn.sigmoid(self.conv1(m))            # N=1 -> XLA path


class GCM:
    """The four branch-head 1x1 convs + conv_res share the input, so they are
    merged into a single N = 5*out_channel 1x1 conv (one MXU call, full lanes).
    The channel-32 branch convs go to the XLA conv path (no 4x-padded lanes)."""

    def __init__(self, in_channel, out_channel):
        C = out_channel
        self.C = C
        self.head = BasicConv2d(in_channel, 5 * C, 1)
        self.branch1_rest = [
            BasicConv2d(C, C, (1, 3), padding=(0, 1)),
            BasicConv2d(C, C, (3, 1), padding=(1, 0)),
            BasicConv2d(C, C, 3, padding=3, dilation=3)]
        self.branch2_rest = [
            BasicConv2d(C, C, (1, 5), padding=(0, 2)),
            BasicConv2d(C, C, (5, 1), padding=(2, 0)),
            BasicConv2d(C, C, 3, padding=5, dilation=5)]
        self.branch3_rest = [
            BasicConv2d(C, C, (1, 7), padding=(0, 3)),
            BasicConv2d(C, C, (7, 1), padding=(3, 0)),
            BasicConv2d(C, C, 3, padding=7, dilation=7)]
        self.conv_cat = BasicConv2d(4 * C, C, 3, padding=1)

    def __call__(self, x):
        C = self.C
        head = self.head(x)
        x0 = head[..., 0:C]
        x1 = head[..., C:2 * C]
        for m in self.branch1_rest:
            x1 = m(x1)
        x2 = head[..., 2 * C:3 * C]
        for m in self.branch2_rest:
            x2 = m(x2)
        x3 = head[..., 3 * C:4 * C]
        for m in self.branch3_rest:
            x3 = m(x3)
        res = head[..., 4 * C:5 * C]
        x_cat = jnp.concatenate((x0, x1, x2, x3), axis=-1)
        return self.conv_cat(x_cat, residual=res, relu=True)   # fused tail


class GloRe:
    """Transpose-free formulation: the channel conv is a batch-flattened 2-D
    Pallas matmul with fused ReLU; the node conv is a Pallas bmm with the 2-D
    weight broadcast via the index_map; projections V / y use contractions
    that need no explicit relayout (L is tiny at these resolutions)."""

    def __init__(self, in_channels):
        self.N = in_channels // 4
        self.S = in_channels // 2
        self.theta = Conv2d(in_channels, self.N, 1, bias=False)
        self.phi = Conv2d(in_channels, self.S, 1, bias=False)
        self.node_w = conv_weight(self.N, self.N, 1, 1).reshape(self.N, self.N)
        cw = conv_weight(self.S, self.S, 1, 1).reshape(self.S, self.S)
        self.chan_w_t = jnp.transpose(cw)                # (S_in, S_out)
        self.conv_2 = Conv2d(self.S, in_channels, 1, bias=False)

    def __call__(self, x):                       # x NHWC (b, H, W, C)
        b, H, W, C = x.shape
        L = H * W
        theta_f = self.theta(x).reshape(b, L, self.N)     # (b, L, N)
        phi_f = self.phi(x).reshape(b, L, self.S)         # (b, L, S) == phi^T
        # V[b,n,s] = sum_l theta[b,l,n] * phi[b,l,s]   (K = L is tiny here)
        V = jnp.einsum('bln,bls->bns',
                       theta_f.astype(jnp.float32), phi_f.astype(jnp.float32))
        V = pallas_bmm(self.node_w, V, relu=True)          # node_conv, fused ReLU
        # channel_conv without transposes: W = relu(V @ cw^T), batch-flattened
        Wm = matmul_fused(V.reshape(b * self.N, self.S), self.chan_w_t,
                          relu=True)
        Wm = Wm.reshape(b, self.N, self.S)
        y = pallas_bmm(theta_f, Wm)                        # (b, L, S)
        # torch does y.view(-1, S, H, W) on the contiguous (b, L, S) buffer
        y = y.reshape(b, self.S, H, W)                     # raw reinterpret
        y = jnp.transpose(y, (0, 2, 3, 1))                 # that NCHW -> NHWC
        y = self.conv_2(y)
        return (x + y).astype(jnp.bfloat16)


class TransBasicBlock:
    def __init__(self, inplanes, planes, stride=1, upsample=None):
        self.cb1 = BasicConv2d(inplanes, inplanes, 3, 1, 1)      # conv1 + bn1
        if upsample is not None and stride != 1:
            self.conv2 = ConvTranspose2d(inplanes, planes, 3, stride, 1, 1,
                                         bias=False)
            self.bn2 = BatchNorm2d(planes)
        else:
            self.conv2 = BasicConv2d(inplanes, planes, 3, stride, 1)  # fused BN
            self.bn2 = None
        self.upsample = upsample

    def __call__(self, x):
        residual = self.upsample(x) if self.upsample is not None else x
        out = self.cb1(x, relu=True)
        if self.bn2 is not None:                 # transpose-conv branch
            out = self.bn2(self.conv2(out))
            out = relu(out + residual).astype(jnp.bfloat16)
        else:                                    # residual + ReLU fused
            out = self.conv2(out, residual=residual, relu=True)
        return out


class Aggregation:
    def __init__(self, channel):
        self.conv_upsample1 = BasicConv2d(channel, channel, 3, padding=1)
        self.conv_upsample2 = BasicConv2d(channel, channel, 3, padding=1)
        self.conv_upsample3 = BasicConv2d(channel, channel, 3, padding=1)
        self.conv_upsample4 = BasicConv2d(channel, channel, 3, padding=1)
        self.conv_upsample5 = BasicConv2d(2 * channel, 2 * channel, 3, padding=1)
        self.conv_concat2 = BasicConv2d(2 * channel, 2 * channel, 3, padding=1)
        self.conv_concat3 = BasicConv2d(3 * channel, 3 * channel, 3, padding=1)

    def __call__(self, x1, x2, x3):
        x1_1 = x1
        x2_1 = self.conv_upsample1(x1) * x2
        x3_1 = self.conv_upsample2(x1) * self.conv_upsample3(x2) * x3
        x2_2 = self.conv_concat2(jnp.concatenate(
            (x2_1, self.conv_upsample4(x1_1)), axis=-1))
        x3_2 = self.conv_concat3(jnp.concatenate(
            (x3_1, self.conv_upsample5(x2_2)), axis=-1))
        return x3_2


class AggregationInit(Aggregation):
    def __call__(self, x1, x2, x3):
        up = upsample_bilinear
        x1_1 = x1
        x2_1 = self.conv_upsample1(up(x1)) * x2
        x3_1 = self.conv_upsample2(up(up(x1))) * self.conv_upsample3(up(x2)) * x3
        x2_2 = self.conv_concat2(jnp.concatenate(
            (x2_1, self.conv_upsample4(up(x1_1))), axis=-1))
        x3_2 = self.conv_concat3(jnp.concatenate(
            (x3_1, self.conv_upsample5(up(x2_2))), axis=-1))
        return x3_2


class AggregationFinal(Aggregation):
    def __call__(self, x1, x2, x3):
        up = upsample_bilinear
        x1_1 = x1
        x2_1 = self.conv_upsample1(up(x1)) * x2
        x3_1 = self.conv_upsample2(up(x1)) * self.conv_upsample3(x2) * x3
        x2_2 = self.conv_concat2(jnp.concatenate(
            (x2_1, self.conv_upsample4(up(x1_1))), axis=-1))
        x3_2 = self.conv_concat3(jnp.concatenate(
            (x3_1, self.conv_upsample5(x2_2)), axis=-1))
        return x3_2


class AgantLayer:
    def __init__(self, inplanes, planes):
        self.cb = BasicConv2d(inplanes, planes, 1)       # conv + fused BN

    def __call__(self, x):
        return self.cb(x, relu=True)                     # ReLU fused


class Bottleneck:
    def __init__(self, cin, mid, stride=1):
        self.cb1 = BasicConv2d(cin, mid, 1)
        self.cb2 = BasicConv2d(mid, mid, 3, stride, 1)
        self.cb3 = BasicConv2d(mid, mid * 4, 1)
        self.down = BasicConv2d(cin, mid * 4, 1, stride)

    def __call__(self, x):
        down = self.down(x)
        out = self.cb1(x, relu=True)
        out = self.cb2(out, relu=True)
        return self.cb3(out, residual=down, relu=True)   # residual+ReLU fused


class ResNet50Stub:
    # TODO(synk): ResNet50('rgb'/'rgbd') source not provided; one bottleneck per
    # stage with the same channel/stride contract as ResNet50.
    def __init__(self):
        self.conv1 = BasicConv2d(3, 64, 7, stride=2, padding=3)   # conv + bn
        self.layer1 = Bottleneck(64, 64, 1)
        self.layer2 = Bottleneck(256, 128, 2)
        self.layer3_1 = Bottleneck(512, 256, 2)
        self.layer4_1 = Bottleneck(1024, 512, 2)

    def stem(self, x):
        return maxpool_3x3_s2_p1(self.conv1(x, relu=True))


# ----------------------------------------------------------------------------
# MaDNet
# ----------------------------------------------------------------------------
class MaDNetPallas:
    def __init__(self, channel=32, img_size=64):
        assert img_size % 32 == 0
        self.resnet = ResNet50Stub()
        self.resnet_depth = ResNet50Stub()

        self.convd1 = Conv2d(2048, 512, 1, bias=True)
        self.convd2 = Conv2d(2048, 512, 1, bias=True)
        self.convd3 = Conv2d(2048, 512, 1, bias=True)
        self.gcn1 = GloRe(512 * 3)
        self.convd4 = Conv2d(2048, 512, 1, bias=True)
        self.convd5 = Conv2d(1024, 512, 1, bias=True)
        self.gcn2 = GloRe(512 * 3)

        self.rfb2_1 = GCM(512, channel)
        self.rfb3_1 = GCM(512, channel)
        self.rfb4_1 = GCM(512, channel)
        self.agg0 = Aggregation(channel)
        self.rfb2_11 = GCM(512, channel)
        self.rfb3_11 = GCM(512, channel)
        self.rfb4_11 = GCM(512, channel)
        self.agg1 = AggregationInit(channel)
        self.rfb0_2 = GCM(64, channel)
        self.rfb1_2 = GCM(256, channel)
        self.rfb5_2 = GCM(512, channel)
        self.agg2 = AggregationFinal(channel)

        self.atten_depth_channel_0 = ChannelAttention(64)
        self.atten_depth_channel_1 = ChannelAttention(256)
        self.atten_depth_channel_2 = ChannelAttention(512)
        self.atten_depth_channel_3_1 = ChannelAttention(1024)
        self.atten_depth_channel_4_1 = ChannelAttention(2048)
        self.atten_depth_spatial_0 = SpatialAttention()
        self.atten_depth_spatial_1 = SpatialAttention()
        self.atten_depth_spatial_2 = SpatialAttention()
        self.atten_depth_spatial_3_1 = SpatialAttention()
        self.atten_depth_spatial_4_1 = SpatialAttention()

        self.conv0 = BasicConv2d(4 * channel, 2 * channel, 3, padding=1)
        self.conv1 = BasicConv2d(2 * channel, 8 * channel, 3, padding=1, stride=2)
        self.conv2 = BasicConv2d(8 * channel, 16 * channel, 3, padding=1, stride=2)
        self.conv3 = BasicConv2d(16 * channel, 32 * channel, 3, padding=1, stride=2)
        self.conv4 = BasicConv2d(32 * channel, 64 * channel, 3, padding=1)

        self.fc = BasicConv2d(3 * channel, 64 * channel, 1)
        self.fc1 = BasicConv2d(3 * channel, 32 * channel, 1)
        self.fc2 = BasicConv2d(3 * channel, 16 * channel, 1)
        self.fc3 = BasicConv2d(3 * channel, 16 * channel, 1)
        self.fc4 = BasicConv2d(3 * channel, 8 * channel, 1)
        self.fc5 = BasicConv2d(3 * channel, 2 * channel, 1)

        # pooling targets scaled to the demo spatial size (see TODO at top)
        self.pool22_size = img_size // 16
        self.pool11_size = img_size // 32

        self.inplanes = 32 * 2
        self.deconv1 = self._make_transpose(32 * 2, 3, stride=2)
        self.inplanes = 32
        self.deconv2 = self._make_transpose(32, 3, stride=2)
        self.agant1 = AgantLayer(32 * 3, 32 * 2)
        self.agant2 = AgantLayer(32 * 2, 32)
        self.out2_conv = Conv2d(32, 1, 1, bias=True)

    def _make_transpose(self, planes, blocks, stride=1):
        upsample = None
        if stride != 1:
            upsample = Sequential([
                ConvTranspose2d(self.inplanes, planes, 2, stride, 0, 0,
                                bias=False),
                BatchNorm2d(planes)])
        elif self.inplanes != planes:
            upsample = Sequential([
                Conv2d(self.inplanes, planes, 1, stride, bias=False),
                BatchNorm2d(planes)])
        layers = []
        for _ in range(1, blocks):
            layers.append(TransBasicBlock(self.inplanes, self.inplanes))
        layers.append(TransBasicBlock(self.inplanes, planes, stride, upsample))
        self.inplanes = planes
        return Sequential(layers)

    def __call__(self, x, x_depth):
        # module interface is NCHW (like PyTorch); compute runs NHWC/bf16
        x = jnp.transpose(x, (0, 2, 3, 1))
        x_depth = jnp.transpose(x_depth, (0, 2, 3, 1))

        x = self.resnet.stem(x)
        x_depth = self.resnet_depth.stem(x_depth)

        x_cat = self.conv0(jnp.concatenate((x, x_depth), axis=-1))
        temp_c = x_cat * self.atten_depth_channel_0(x_cat)
        x_cat = temp_c * self.atten_depth_spatial_0(temp_c)
        temp = x_depth * self.atten_depth_channel_0(x_depth)
        temp = temp * self.atten_depth_spatial_0(temp)
        x = x + temp

        x1 = self.resnet.layer1(x)
        x1_depth = self.resnet_depth.layer1(x_depth)
        x_cat1 = self.conv1(x_cat)
        temp = x_cat1 * self.atten_depth_channel_1(x_cat1)
        x_cat1 = temp * self.atten_depth_spatial_1(temp)
        temp = x1_depth * self.atten_depth_channel_1(x1_depth)
        temp = temp * self.atten_depth_spatial_1(temp)
        x1 = x1 + temp

        x2 = self.resnet.layer2(x1)
        x2_depth = self.resnet_depth.layer2(x1_depth)
        x_cat2 = self.conv2(x_cat1)
        temp = x_cat2 * self.atten_depth_channel_2(x_cat2)
        x_cat2 = temp * self.atten_depth_spatial_2(temp)
        temp = x2_depth * self.atten_depth_channel_2(x2_depth)
        temp = temp * self.atten_depth_spatial_2(temp)
        x2 = x2 + temp

        x2_1 = x2
        x3_1 = self.resnet.layer3_1(x2_1)
        x3_1_depth = self.resnet_depth.layer3_1(x2_depth)
        x_cat3 = self.conv3(x_cat2)
        temp = x_cat3 * self.atten_depth_channel_3_1(x_cat3)
        x_cat3 = temp * self.atten_depth_spatial_3_1(temp)
        temp = x3_1_depth * self.atten_depth_channel_3_1(x3_1_depth)
        temp = temp * self.atten_depth_spatial_3_1(temp)
        x3_1 = x3_1 + temp

        x4_1 = self.resnet.layer4_1(x3_1)
        x4_1_depth = self.resnet_depth.layer4_1(x3_1_depth)
        x_cat4 = self.conv4(x_cat3)
        temp = x_cat4 * self.atten_depth_channel_4_1(x_cat4)
        x_cat4 = temp * self.atten_depth_spatial_4_1(temp)
        temp = x4_1_depth * self.atten_depth_channel_4_1(x4_1_depth)
        temp = temp * self.atten_depth_spatial_4_1(temp)
        x4_1 = x4_1 + temp

        x4_1_depth_g = self.convd1(x4_1_depth)
        x_cat4_g = self.convd2(x_cat4)
        x4_1_g = self.convd3(x4_1)
        gcn_out1 = self.gcn1(jnp.concatenate(
            (x4_1_depth_g, x_cat4_g, x4_1_g), axis=-1))
        x4_1_depth_gg = gcn_out1[..., :512]
        x_cat4_gg = gcn_out1[..., 512:1024]
        x4_1_gg = gcn_out1[..., 1024:1536]
        x4_1_depth_ggg = self.rfb2_1(x4_1_depth_gg)
        x_cat4_ggg = self.rfb3_1(x_cat4_gg)
        x4_1_ggg = self.rfb4_1(x4_1_gg)
        out = self.agg0(x4_1_depth_ggg, x_cat4_ggg, x4_1_ggg)

        out_1 = adaptive_avg_pool(out, 1)
        weighting = jax.nn.softmax(out_1.astype(jnp.float32), axis=-1)
        weighting_2_1 = self.fc(weighting)
        x4_1_w = x4_1 * weighting_2_1
        weight_3_1 = self.fc1(weighting)
        x3_1_w = x3_1 * weight_3_1
        weight_4_1 = self.fc2(weighting)
        x2_1_w = x2_1 * weight_4_1

        x4_1_w_g = upsample_bilinear(self.convd4(x4_1_w), 4)
        x3_1_w_g = upsample_bilinear(self.convd5(x3_1_w), 2)
        x2_1_w_g = x2_1_w
        gcn_out2 = self.gcn2(jnp.concatenate(
            (x4_1_w_g, x3_1_w_g, x2_1_w_g), axis=-1))
        x4_1_w_gg = gcn_out2[..., :512]
        x3_1_w_gg = gcn_out2[..., 512:1024]
        x2_1_w_gg = gcn_out2[..., 1024:1536]
        x2_1_w_ggg = self.rfb2_11(x2_1_w_gg)
        x3_1_w_ggg = self.rfb3_11(x3_1_w_gg)
        x4_1_w_ggg = self.rfb4_11(x4_1_w_gg)
        x4_1_w_ggg = adaptive_avg_pool(x4_1_w_ggg, self.pool11_size)
        x3_1_w_ggg = adaptive_avg_pool(x3_1_w_ggg, self.pool22_size)
        out_2 = self.agg1(x4_1_w_ggg, x3_1_w_ggg, x2_1_w_ggg)

        out_3 = adaptive_avg_pool(out_2, 1)
        weighter_1 = jax.nn.softmax(out_3.astype(jnp.float32), axis=-1)
        weighting_2 = self.fc3(weighter_1)
        x4_1_ww = x2 * weighting_2
        weighting_1 = self.fc4(weighter_1)
        x3_1_ww = x1 * weighting_1
        weighting_0 = self.fc5(weighter_1)
        x2_1_ww = x * weighting_0

        x5_2 = self.rfb5_2(x4_1_ww)
        x1_2 = self.rfb1_2(x3_1_ww)
        x0_2 = self.rfb0_2(x2_1_ww)
        y = self.agg2(x5_2, x1_2, x0_2)

        y = self.agant1(y)
        y = self.deconv1(y)
        y = self.agant2(y)
        y = self.deconv2(y)
        y = self.out2_conv(y)
        return jnp.transpose(y, (0, 3, 1, 2)).astype(jnp.float32)  # NCHW, f32


# ----------------------------------------------------------------------------
if __name__ == "__main__":
    key = jax.random.PRNGKey(0)
    k1, k2 = jax.random.split(key)
    H = 64
    x = jax.random.normal(k1, (2, 3, H, H), jnp.float32)
    x_depth = jax.random.normal(k2, (2, 3, H, H), jnp.float32)

    model = MaDNetPallas(channel=32, img_size=H)
    y = model(x, x_depth)
    y = jax.block_until_ready(y)

    assert y.shape == (2, 1, H, H), y.shape
    assert bool(jnp.all(jnp.isfinite(y)))
    print("KERNEL_OK")
</pallas_src>

<mosaic_0001>
module attributes {stable_mosaic.version = 11 : i64} {
  func.func @kernel(%arg0: i32, %arg1: i32, %arg2: i32, %arg3: memref<64x128xbf16, #tpu.memory_space<vmem>>, %arg4: memref<128x256xbf16, #tpu.memory_space<vmem>>, %arg5: memref<1x256xf32, #tpu.memory_space<vmem>>, %arg6: memref<64x256xbf16, #tpu.memory_space<vmem>>, %arg7: memref<64x256xf32, #tpu.memory_space<vmem>>) attributes {dimension_semantics = [#tpu.dimension_semantics<parallel>, #tpu.dimension_semantics<parallel>, #tpu.dimension_semantics<arbitrary>], iteration_bounds = array<i64: 2, 1, 5>, scalar_prefetch = 0 : i64, scratch_operands = 1 : i64, tpu.core_type = #tpu.core_type<tc>, window_params = [{transform_indices = @transform_0, window_bounds = array<i64: 64, 128>}, {transform_indices = @transform_1, window_bounds = array<i64: 128, 256>}, {transform_indices = @transform_2, window_bounds = array<i64: 1, 256>}, {transform_indices = @transform_3, window_bounds = array<i64: 64, 256>}]} {
    %c0_i32 = arith.constant 0 : i32
    %0 = arith.cmpi eq, %arg2, %c0_i32 : i32
    %1 = arith.extui %0 : i1 to i32
    %c0_i32_0 = arith.constant 0 : i32
    %2 = arith.cmpi ne, %1, %c0_i32_0 : i32
    scf.if %2 {
      %cst_9 = arith.constant 0.000000e+00 : f32
      %12 = vector.broadcast %cst_9 : f32 to vector<64x256xf32>
      %c0_10 = arith.constant 0 : index
      %c0_11 = arith.constant 0 : index
      %13 = vector.load %arg7[%c0_10, %c0_11] : memref<64x256xf32, #tpu.memory_space<vmem>>, vector<64x256xf32>
      tpu.vector_store %arg7[%c0_10, %c0_11], %12 {strides = array<i32>} : memref<64x256xf32, #tpu.memory_space<vmem>>, vector<64x256xf32>,
    } else {
    }
    %c0 = arith.constant 0 : index
    %c0_1 = arith.constant 0 : index
    %3 = vector.load %arg7[%c0, %c0_1] : memref<64x256xf32, #tpu.memory_space<vmem>>, vector<64x256xf32>
    %c0_2 = arith.constant 0 : index
    %c0_3 = arith.constant 0 : index
    %4 = vector.load %arg3[%c0_2, %c0_3] : memref<64x128xbf16, #tpu.memory_space<vmem>>, vector<64x128xbf16>
    %c0_4 = arith.constant 0 : index
    %c0_5 = arith.constant 0 : index
    %5 = vector.load %arg4[%c0_4, %c0_5] : memref<128x256xbf16, #tpu.memory_space<vmem>>, vector<128x256xbf16>
    %cst = arith.constant dense<0.000000e+00> : vector<64x256xf32>
    %6 = tpu.matmul %4, %5, %cst {dimension_numbers = #tpu.dot_dimension_numbers<[1], [0], [0], [1], [0, 0, 1, 1], [], []>} : vector<64x128xbf16>, vector<128x256xbf16>, vector<64x256xf32> -> vector<64x256xf32>
    %7 = arith.addf %3, %6 : vector<64x256xf32>
    %c0_6 = arith.constant 0 : index
    %c0_7 = arith.constant 0 : index
    %8 = vector.load %arg7[%c0_6, %c0_7] : memref<64x256xf32, #tpu.memory_space<vmem>>, vector<64x256xf32>
    tpu.vector_store %arg7[%c0_6, %c0_7], %7 {strides = array<i32>} : memref<64x256xf32, #tpu.memory_space<vmem>>, vector<64x256xf32>,
    %c4_i32 = arith.constant 4 : i32
    %9 = arith.cmpi eq, %arg2, %c4_i32 : i32
    %10 = arith.extui %9 : i1 to i32
    %c0_i32_8 = arith.constant 0 : i32
    %11 = arith.cmpi ne, %10, %c0_i32_8 : i32
    scf.if %11 {
      %c0_9 = arith.constant 0 : index
      %c0_10 = arith.constant 0 : index
      %12 = vector.load %arg7[%c0_9, %c0_10] : memref<64x256xf32, #tpu.memory_space<vmem>>, vector<64x256xf32>
      %c0_11 = arith.constant 0 : index
      %c0_12 = arith.constant 0 : index
      %13 = vector.load %arg5[%c0_11, %c0_12] : memref<1x256xf32, #tpu.memory_space<vmem>>, vector<1x256xf32>
      %14 = vector.broadcast %13 : vector<1x256xf32> to vector<64x256xf32>
      %15 = arith.addf %12, %14 : vector<64x256xf32>
      %16 = arith.truncf %15 : vector<64x256xf32> to vector<64x256xbf16>
      %c0_13 = arith.constant 0 : index
      %c0_14 = arith.constant 0 : index
      %17 = vector.load %arg6[%c0_13, %c0_14] : memref<64x256xbf16, #tpu.memory_space<vmem>>, vector<64x256xbf16>
      tpu.vector_store %arg6[%c0_13, %c0_14], %16 {strides = array<i32>} : memref<64x256xbf16, #tpu.memory_space<vmem>>, vector<64x256xbf16>,
    } else {
    }
    return
  }
  func.func @transform_0(%arg0: i32, %arg1: i32, %arg2: i32) -> (i32, i32) {
    %c0_i32 = arith.constant 0 : i32
    return %arg0, %arg2 : i32, i32
  }
  func.func @transform_1(%arg0: i32, %arg1: i32, %arg2: i32) -> (i32, i32) {
    %c0_i32 = arith.constant 0 : i32
    return %arg2, %arg1 : i32, i32
  }
  func.func @transform_2(%arg0: i32, %arg1: i32, %arg2: i32) -> (i32, i32) {
    %c0_i32 = arith.constant 0 : i32
    %c0_i32_0 = arith.constant 0 : i32
    return %c0_i32, %arg1 : i32, i32
  }
  func.func @transform_3(%arg0: i32, %arg1: i32, %arg2: i32) -> (i32, i32) {
    %c0_i32 = arith.constant 0 : i32
    return %arg0, %arg1 : i32, i32
  }
}

</mosaic_0001>

<llo_original>
// kernel: tpu_custom_call.1
$region0: #{tpu_custom_call.1}
  #allocation0 [shape = 'u32[]', space=smem, size = 0x4, offset = 0x4, fixed_abs, tag = 'smem constant byte address 0x4 - core index']
  #allocation1 [shape = 'u32[144,128]{1,0:T(1,128)}', space=vmem, size = 0x12000, scoped, tag = 'internal scratch']
  #allocation2 [shape = 'f32[64,256]{1,0:T(8,128)}', space=vmem, size = 0x10000, scoped, tag = 'scratch operand']
  %s0 = inlined_call_operand.hbm [shape: bf16[128,640], index: 0, kind: input, shape index: {}]
  %s1 = inlined_call_operand.hbm [shape: bf16[640,256], index: 1, kind: input, shape index: {}]
  %s2 = inlined_call_operand.vmem [shape: f32[1,256], index: 2, kind: input, shape index: {}]
  %s3 = inlined_call_operand.hbm [shape: bf16[128,256], index: 3, kind: output, shape index: {}]
  %s4 = sld [smem:[#allocation0]]
  $region61: #{tpu_custom_call.1} parent=0
    _
  %s6 = ssub.s32 1, %s4
  %s7 = scalar_select 0, %s6, %s4
  $region1: #{tpu_custom_call.1} parent=0
    #allocation3 [shape = 'u8[32768]{0}', space=vmem, size = 0x8000, scoped, tag = 'input window, operand 0']
    #allocation4 [shape = 's32[2]{0}', space=sflag, size = 0x8, scoped, tag = 'scoped memory for tpu_custom_call.1']
    #allocation5 [shape = 's32[2]{0}', space=sflag, size = 0x8, scoped, tag = 'scoped memory for tpu_custom_call.1']
    #allocation6 [shape = 'u8[131072]{0}', space=vmem, size = 0x20000, scoped, tag = 'input window, operand 1']
    #allocation7 [shape = 's32[2]{0}', space=sflag, size = 0x8, scoped, tag = 'scoped memory for tpu_custom_call.1']
    #allocation8 [shape = 'u8[65536]{0}', space=vmem, size = 0x10000, scoped, tag = 'output window, operand 0']
    %8 = vsyncpa [#allocation4], 0
    %s9 = scalar_lea.sflag [#allocation4], 1
    %10 = vsyncpa %s9, 0
    %11 = vsyncpa [#allocation7], 0
    %s12 = scalar_lea.sflag [#allocation7], 1
    %13 = vsyncpa %s12, 0
    %14 = vsyncpa [#allocation5], 0
    %s15 = scalar_lea.sflag [#allocation5], 1
    %16 = vsyncpa %s15, 0
    loop: start=0, step=1, limit=12
    $region2: #{tpu_custom_call.1} parent=1 // loop_pre_header
      _
    $region3: #{tpu_custom_call.1} parent=1 // loop_header
      %s18 = sphi 0, %s22
      %p19 = scmp.ge.s32.totalorder %s18, 12
      %s25 = sphi 0, %s44
      %s26 = sphi 0, %s40
      %s27 = sphi 0, %s36
      %s28 = sphi 0, %s25
      %s29 = sphi 0, %s26
      %s30 = sphi 0, %s27
      %s31 = sphi 0, %s28
      %s32 = sphi 0, %s29
      %s33 = sphi 0, %s30
      %s49 = sphi 0, %s51
      %s52 = sphi 0, %s49
      %s53 = sphi 0, %s52
      %s69 = sphi 0, %s53
      %s77 = sphi 0, %s79
      %s80 = sphi 0, %s77
      %s81 = sphi 0, %s80
      %s97 = sphi 0, %s81
      %s103 = sphi 0, %s105
      %s106 = sphi 0, %s103
      %s107 = sphi 0, %s106
      %s123 = sphi 0, %s107
      %s131 = sphi 0, %s133
      %s134 = sphi 0, %s131
      %s135 = sphi 0, %s134
      %s151 = sphi 0, %s135
    $region4: #{tpu_custom_call.1} parent=1 // loop_header_branch
      %21 = sbr.rel (%p19) target = $region8
    $region5: #{tpu_custom_call.1} parent=1 // loop_body
      %s23 = ssub.s32 %s18, 1
      %s24 = ssub.s32 %s18, 2
      %s34 = sadd.s32 1, %s27
      %p35 = scmp.ge.s32.totalorder %s34, 5
      %s36 = scalar_select %p35, 0, %s34
      %s37 = sadd.s32 1, %s26
      %s38 = scalar_select %p35, %s37, %s26
      %p39 = scmp.ge.s32.totalorder %s38, 1
      %s40 = scalar_select %p39, 0, %s38
      %s41 = sadd.s32 1, %s25
      %s42 = scalar_select %p39, %s41, %s25
      %p43 = scmp.ge.s32.totalorder %s42, 2
      %s44 = scalar_select %p43, 0, %s42
      %s45 = ssub.s32 %s25, %s44
      %s46 = ssub.s32 %s27, %s36
      %s47 = sor.u32 %s45, %s46
      %p48 = scmp.eq.s32.totalorder %s47, 0
      %s50 = sadd.s32 %s49, 1
      %s51 = scalar_select %p48, %s49, %s50
      %p54 = pneg %p48
      %p55 = scmp.eq.s32.totalorder %s18, 9
      %p56 = por %p54, %p55
      %p57 = scmp.ne.s32.totalorder %s49, %s52
      %p58 = scmp.eq.s32.totalorder %s18, 0
      %p59 = por %p57, %p58
      %p60 = scmp.ne.s32.totalorder %s49, %s52
      %p61 = scmp.eq.s32.totalorder %s23, 9
      %p62 = por %p60, %p61
      %p63 = scmp.ne.s32.totalorder %s52, %s53
      %p64 = scmp.eq.s32.totalorder %s23, 0
      %p65 = por %p63, %p64
      %p66 = scmp.ne.s32.totalorder %s52, %s53
      %p67 = scmp.eq.s32.totalorder %s24, 9
      %p68 = por %p66, %p67
      %p70 = scmp.ne.s32.totalorder %s53, %s69
      %p71 = scmp.eq.s32.totalorder %s24, 0
      %p72 = por %p70, %p71
      %s73 = ssub.s32 %s27, %s36
      %s74 = ssub.s32 %s26, %s40
      %s75 = sor.u32 %s73, %s74
      %p76 = scmp.eq.s32.totalorder %s75, 0
      %s78 = sadd.s32 %s77, 1
      %s79 = scalar_select %p76, %s77, %s78
      %p82 = pneg %p76
      %p83 = scmp.eq.s32.totalorder %s18, 9
      %p84 = por %p82, %p83
      %p85 = scmp.ne.s32.totalorder %s77, %s80
      %p86 = scmp.eq.s32.totalorder %s18, 0
      %p87 = por %p85, %p86
      %p88 = scmp.ne.s32.totalorder %s77, %s80
      %p89 = scmp.eq.s32.totalorder %s23, 9
      %p90 = por %p88, %p89
      %p91 = scmp.ne.s32.totalorder %s80, %s81
      %p92 = scmp.eq.s32.totalorder %s23, 0
      %p93 = por %p91, %p92
      %p94 = scmp.ne.s32.totalorder %s80, %s81
      %p95 = scmp.eq.s32.totalorder %s24, 9
      %p96 = por %p94, %p95
      %p98 = scmp.ne.s32.totalorder %s81, %s97
      %p99 = scmp.eq.s32.totalorder %s24, 0
      %p100 = por %p98, %p99
      %s101 = ssub.s32 %s26, %s40
      %p102 = scmp.eq.s32.totalorder %s101, 0
      %s104 = sadd.s32 %s103, 1
      %s105 = scalar_select %p102, %s103, %s104
      %p108 = pneg %p102
      %p109 = scmp.eq.s32.totalorder %s18, 9
      %p110 = por %p108, %p109
      %p111 = scmp.ne.s32.totalorder %s103, %s106
      %p112 = scmp.eq.s32.totalorder %s18, 0
      %p113 = por %p111, %p112
      %p114 = scmp.ne.s32.totalorder %s103, %s106
      %p115 = scmp.eq.s32.totalorder %s23, 9
      %p116 = por %p114, %p115
      %p117 = scmp.ne.s32.totalorder %s106, %s107
      %p118 = scmp.eq.s32.totalorder %s23, 0
      %p119 = por %p117, %p118
      %p120 = scmp.ne.s32.totalorder %s106, %s107
      %p121 = scmp.eq.s32.totalorder %s24, 9
      %p122 = por %p120, %p121
      %p124 = scmp.ne.s32.totalorder %s107, %s123
      %p125 = scmp.eq.s32.totalorder %s24, 0
      %p126 = por %p124, %p125
      %s127 = ssub.s32 %s25, %s44
      %s128 = ssub.s32 %s26, %s40
      %s129 = sor.u32 %s127, %s128
      %p130 = scmp.eq.s32.totalorder %s129, 0
      %s132 = sadd.s32 %s131, 1
      %s133 = scalar_select %p130, %s131, %s132
      %p136 = pneg %p130
      %p137 = scmp.eq.s32.totalorder %s18, 9
      %p138 = por %p136, %p137
      %p139 = scmp.ne.s32.totalorder %s131, %s134
      %p140 = scmp.eq.s32.totalorder %s18, 0
      %p141 = por %p139, %p140
      %p142 = scmp.ne.s32.totalorder %s131, %s134
      %p143 = scmp.eq.s32.totalorder %s23, 9
      %p144 = por %p142, %p143
      %p145 = scmp.ne.s32.totalorder %s134, %s135
      %p146 = scmp.eq.s32.totalorder %s23, 0
      %p147 = por %p145, %p146
      %p148 = scmp.ne.s32.totalorder %s134, %s135
      %p149 = scmp.eq.s32.totalorder %s24, 9
      %p150 = por %p148, %p149
      %p152 = scmp.ne.s32.totalorder %s135, %s151
      %p153 = scmp.eq.s32.totalorder %s24, 0
      %p154 = por %p152, %p153
      %p155 = scmp.le.s32.totalorder 1, %s18
      %p156 = scmp.lt.s32.totalorder %s18, 11
      %p157 = pnand %p155, %p156
      %p158 = pneg %p157
      // Predicated region
      $region9: #{tpu_custom_call.1} parent=5 // pred_check
        _
      $region10: #{tpu_custom_call.1} parent=5 // pred_check_branch
        %160 = sbr.rel (%p157) target = $region12
      $region11: #{tpu_custom_call.1} parent=5 // pred_region
        %s161 = ssub.s32 %s18, 1
        // Predicated region
        $region13: #{tpu_custom_call.1} parent=11 // pred_check
          %p162 = pneg %p119
        $region14: #{tpu_custom_call.1} parent=11 // pred_check_branch
          %164 = sbr.rel (%p162) target = $region16
        $region15: #{tpu_custom_call.1} parent=11 // pred_region
          %s165 = smul.u32 2, %s29
          %p166 = scmp.lt.s32.totalorder %s165, 1
          %s167 = scalar_select %p166, %s165, 1
          %s168 = scalar_lea.vmem %s2, %s167
          %s169 = smul.u32 2, %s29
        $region16: #{tpu_custom_call.1} parent=11 // pred_fallthru
          _
      $region12: #{tpu_custom_call.1} parent=5 // pred_fallthru
        _
      %p170 = scmp.lt.s32.totalorder %s18, 10
      // Predicated region
      $region17: #{tpu_custom_call.1} parent=5 // pred_check
        %p171 = pneg %p170
      $region18: #{tpu_custom_call.1} parent=5 // pred_check_branch
        %173 = sbr.rel (%p171) target = $region20
      $region19: #{tpu_custom_call.1} parent=5 // pred_region
        // Predicated region
        $region21: #{tpu_custom_call.1} parent=19 // pred_check
          %p174 = pneg %p59
        $region22: #{tpu_custom_call.1} parent=19 // pred_check_branch
          %176 = sbr.rel (%p174) target = $region24
        $region23: #{tpu_custom_call.1} parent=19 // pred_region
          %s177 = sand.u32 %s49, 1
          %s178 = scalar_lea.sflag [#allocation4], %s177
          %s179 = sand.u32 %s49, 1
          %s180 = smul.addr %s179, 32
          %s181 = scalar_lea.vmem [#allocation3], %s180
          %s182 = smul.u32 8, %s25
          %s184 = ssub.s32 512, 512
          %185 = vsyncadd %s178, %s184
          %s186 = smul.addr %s182, 5
          %s187 = sadd.s32 %s27, %s186
          %s188 = smul.addr %s187, 64
          %s189 = scalar_lea.hbm %s0, %s188
          %s190 = sshll.u32 %s181, 4
          %s191 = int_to_ptr.vmem [resolvable:$true] %s190
          %196 = dma.hbm_to_vmem [thread:$0]  %s189, 512, %s191, %s178, 320, 64, 4
        $region24: #{tpu_custom_call.1} parent=19 // pred_fallthru
          _
        // Predicated region
        $region25: #{tpu_custom_call.1} parent=19 // pred_check
          %p197 = pneg %p87
        $region26: #{tpu_custom_call.1} parent=19 // pred_check_branch
          %199 = sbr.rel (%p197) target = $region28
        $region27: #{tpu_custom_call.1} parent=19 // pred_region
          %s200 = sand.u32 %s77, 1
          %s201 = scalar_lea.sflag [#allocation7], %s200
          %s202 = sand.u32 %s77, 1
          %s203 = smul.addr %s202, 128
          %s204 = scalar_lea.vmem [#allocation6], %s203
          %s205 = smul.u32 16, %s27
          %s206 = smul.u32 2, %s26
          %s208 = ssub.s32 2048, 2048
          %209 = vsyncadd %s201, %s208
          %s210 = smul.addr %s205, 2
          %s211 = sadd.s32 %s206, %s210
          %s212 = smul.addr %s211, 64
          %s213 = scalar_lea.hbm %s1, %s212
          %s214 = sshll.u32 %s204, 4
          %s215 = int_to_ptr.vmem [resolvable:$true] %s214
          %220 = dma.hbm_to_vmem [thread:$0]  %s213, 2048, %s215, %s201, 128, 128, 8
        $region28: #{tpu_custom_call.1} parent=19 // pred_fallthru
          _
      $region20: #{tpu_custom_call.1} parent=5 // pred_fallthru
        _
      %p221 = scmp.le.s32.totalorder 1, %s18
      %p222 = scmp.lt.s32.totalorder %s18, 11
      %p223 = pnand %p221, %p222
      %p224 = pneg %p223
      // Predicated region
      $region29: #{tpu_custom_call.1} parent=5 // pred_check
        _
      $region30: #{tpu_custom_call.1} parent=5 // pred_check_branch
        %226 = sbr.rel (%p223) target = $region32
      $region31: #{tpu_custom_call.1} parent=5 // pred_region
        %s227 = ssub.s32 %s18, 1
        %s228 = sand.u32 %s52, 1
        %s229 = scalar_lea.sflag [#allocation4], %s228
        %s230 = sand.u32 %s52, 1
        %s231 = smul.addr %s230, 32
        %s232 = scalar_lea.vmem [#allocation3], %s231
        // Predicated region
        $region33: #{tpu_custom_call.1} parent=31 // pred_check
          %p233 = pneg %p65
        $region34: #{tpu_custom_call.1} parent=31 // pred_check_branch
          %235 = sbr.rel (%p233) target = $region36
        $region35: #{tpu_custom_call.1} parent=31 // pred_region
          %236 = dma.done %s229, 512
        $region36: #{tpu_custom_call.1} parent=31 // pred_fallthru
          _
        %s237 = sand.u32 %s80, 1
        %s238 = scalar_lea.sflag [#allocation7], %s237
        %s239 = sand.u32 %s80, 1
        %s240 = smul.addr %s239, 128
        %s241 = scalar_lea.vmem [#allocation6], %s240
        // Predicated region
        $region37: #{tpu_custom_call.1} parent=31 // pred_check
          %p242 = pneg %p93
        $region38: #{tpu_custom_call.1} parent=31 // pred_check_branch
          %244 = sbr.rel (%p242) target = $region40
        $region39: #{tpu_custom_call.1} parent=31 // pred_region
          %245 = dma.done %s238, 2048
        $region40: #{tpu_custom_call.1} parent=31 // pred_fallthru
          _
        %s246 = sand.u32 %s52, 1
        %s247 = scalar_lea.sflag [#allocation4], %s246
        %s248 = sand.u32 %s52, 1
        %s249 = smul.addr %s248, 32
        %s250 = scalar_lea.vmem [#allocation3], %s249
        %p251 = pneg %p65
        %p252 = pneg %p62
        %s253 = sand.u32 %s80, 1
        %s254 = scalar_lea.sflag [#allocation7], %s253
        %s255 = sand.u32 %s80, 1
        %s256 = smul.addr %s255, 128
        %s257 = scalar_lea.vmem [#allocation6], %s256
        %p258 = pneg %p93
        %p259 = pneg %p90
        %s260 = smul.u32 2, %s29
        %p261 = scmp.lt.s32.totalorder %s260, 1
        %s262 = scalar_select %p261, %s260, 1
        %s263 = scalar_lea.vmem %s2, %s262
        %p264 = pneg %p119
        %p265 = pneg %p116
        %p266 = pneg %p147
        %p267 = pneg %p144
        %s268 = sand.u32 %s134, 1
        %s269 = scalar_lea.sflag [#allocation5], %s268
        %s270 = sand.u32 %s134, 1
        %s271 = smul.addr %s270, 64
        %s272 = scalar_lea.vmem [#allocation8], %s271
        %s273 = smul.u32 8, %s28
        %s274 = smul.u32 16, %s30
        %s275 = smul.u32 2, %s29
        %s276 = smul.u32 2, %s29
        %p277 = scmp.lt.s32.totalorder %s276, 1
        %s278 = scalar_select %p277, %s276, 1
        %s279 = scalar_lea.vmem %s2, %s278
        %s280 = smul.u32 2, %s29
        %s281 = smul.u32 8, %s28
        %s282 = smul.u32 2, %s29
        %p284 = scmp.eq.s32.totalorder %s30, 0
        // Predicated region
        $region41: #{tpu_custom_call.1} parent=31 // pred_check
          %p285 = pneg %p284
        $region42: #{tpu_custom_call.1} parent=31 // pred_check_branch
          %287 = sbr.rel (%p285) target = $region44
        $region43: #{tpu_custom_call.1} parent=31 // pred_region
          %288 = vst [vmem:[#allocation2] sm:$0xff] 0.0
          %289 = vst [vmem:[#allocation2 + $0x8] sm:$0xff] 0.0
          %290 = vst [vmem:[#allocation2 + $0x10] sm:$0xff] 0.0
          %291 = vst [vmem:[#allocation2 + $0x18] sm:$0xff] 0.0
          %292 = vst [vmem:[#allocation2 + $0x20] sm:$0xff] 0.0
          %293 = vst [vmem:[#allocation2 + $0x28] sm:$0xff] 0.0
          %294 = vst [vmem:[#allocation2 + $0x30] sm:$0xff] 0.0
          %295 = vst [vmem:[#allocation2 + $0x38] sm:$0xff] 0.0
          %296 = vst [vmem:[#allocation2 + $0x40] sm:$0xff] 0.0
          %297 = vst [vmem:[#allocation2 + $0x48] sm:$0xff] 0.0
          %298 = vst [vmem:[#allocation2 + $0x50] sm:$0xff] 0.0
          %299 = vst [vmem:[#allocation2 + $0x58] sm:$0xff] 0.0
          %300 = vst [vmem:[#allocation2 + $0x60] sm:$0xff] 0.0
          %301 = vst [vmem:[#allocation2 + $0x68] sm:$0xff] 0.0
          %302 = vst [vmem:[#allocation2 + $0x70] sm:$0xff] 0.0
          %303 = vst [vmem:[#allocation2 + $0x78] sm:$0xff] 0.0
        $region44: #{tpu_custom_call.1} parent=31 // pred_fallthru
          _
        %v304 = vld [vmem:[#allocation2] sm:$0xff]
        %v305 = vld [vmem:[#allocation2 + $0x8] sm:$0xff]
        %v306 = vld [vmem:[#allocation2 + $0x10] sm:$0xff]
        %v307 = vld [vmem:[#allocation2 + $0x18] sm:$0xff]
        %v308 = vld [vmem:[#allocation2 + $0x20] sm:$0xff]
        %v309 = vld [vmem:[#allocation2 + $0x28] sm:$0xff]
        %v310 = vld [vmem:[#allocation2 + $0x30] sm:$0xff]
        %v311 = vld [vmem:[#allocation2 + $0x38] sm:$0xff]
        %v312 = vld [vmem:[#allocation2 + $0x40] sm:$0xff]
        %v313 = vld [vmem:[#allocation2 + $0x48] sm:$0xff]
        %v314 = vld [vmem:[#allocation2 + $0x50] sm:$0xff]
        %v315 = vld [vmem:[#allocation2 + $0x58] sm:$0xff]
        %v316 = vld [vmem:[#allocation2 + $0x60] sm:$0xff]
        %v317 = vld [vmem:[#allocation2 + $0x68] sm:$0xff]
        %v318 = vld [vmem:[#allocation2 + $0x70] sm:$0xff]
        %v319 = vld [vmem:[#allocation2 + $0x78] sm:$0xff]
        %v320 = vld [vmem:[%s232] sm:$0xf]
        %v321 = vld [vmem:[%s232 + $0x4] sm:$0xf]
        %v322 = vld [vmem:[%s232 + $0x8] sm:$0xf]
        %v323 = vld [vmem:[%s232 + $0xc] sm:$0xf]
        %v324 = vld [vmem:[%s232 + $0x10] sm:$0xf]
        %v325 = vld [vmem:[%s232 + $0x14] sm:$0xf]
        %v326 = vld [vmem:[%s232 + $0x18] sm:$0xf]
        %v327 = vld [vmem:[%s232 + $0x1c] sm:$0xf]
        %v328 = vld [vmem:[%s241] sm:$0xff]
        %v329 = vld [vmem:[%s241 + $0x8] sm:$0xff]
        %v330 = vld [vmem:[%s241 + $0x10] sm:$0xff]
        %v331 = vld [vmem:[%s241 + $0x18] sm:$0xff]
        %v332 = vld [vmem:[%s241 + $0x20] sm:$0xff]
        %v333 = vld [vmem:[%s241 + $0x28] sm:$0xff]
        %v334 = vld [vmem:[%s241 + $0x30] sm:$0xff]
        %v335 = vld [vmem:[%s241 + $0x38] sm:$0xff]
        %v336 = vld [vmem:[%s241 + $0x40] sm:$0xff]
        %v337 = vld [vmem:[%s241 + $0x48] sm:$0xff]
        %v338 = vld [vmem:[%s241 + $0x50] sm:$0xff]
        %v339 = vld [vmem:[%s241 + $0x58] sm:$0xff]
        %v340 = vld [vmem:[%s241 + $0x60] sm:$0xff]
        %v341 = vld [vmem:[%s241 + $0x68] sm:$0xff]
        %v342 = vld [vmem:[%s241 + $0x70] sm:$0xff]
        %v343 = vld [vmem:[%s241 + $0x78] sm:$0xff]
        %v352 = vunpack.c.l.b16 %v320
        %v353 = vunpack.c.l.b16 %v321
        %v354 = vunpack.c.l.b16 %v322
        %v355 = vunpack.c.l.b16 %v323
        %v356 = vunpack.c.l.b16 %v324
        %v357 = vunpack.c.l.b16 %v325
        %v358 = vunpack.c.l.b16 %v326
        %v359 = vunpack.c.l.b16 %v327
        %v360 = vpack.c.b16 %v353, %v352
        %v361 = vpack.c.b16 %v355, %v354
        %v362 = vpack.c.b16 %v357, %v356
        %v363 = vpack.c.b16 %v359, %v358
        %v384 = vunpack.c.l.b16 %v328
        %v385 = vunpack.c.h.b16 %v328
        %v386 = vunpack.c.l.b16 %v329
        %v387 = vunpack.c.h.b16 %v329
        %v388 = vunpack.c.l.b16 %v330
        %v389 = vunpack.c.h.b16 %v330
        %v390 = vunpack.c.l.b16 %v331
        %v391 = vunpack.c.h.b16 %v331
        %v392 = vunpack.c.l.b16 %v332
        %v393 = vunpack.c.h.b16 %v332
        %v394 = vunpack.c.l.b16 %v333
        %v395 = vunpack.c.h.b16 %v333
        %v396 = vunpack.c.l.b16 %v334
        %v397 = vunpack.c.h.b16 %v334
        %v398 = vunpack.c.l.b16 %v335
        %v399 = vunpack.c.h.b16 %v335
        %v400 = vunpack.c.l.b16 %v336
        %v401 = vunpack.c.h.b16 %v336
        %v402 = vunpack.c.l.b16 %v337
        %v403 = vunpack.c.h.b16 %v337
        %v404 = vunpack.c.l.b16 %v338
        %v405 = vunpack.c.h.b16 %v338
        %v406 = vunpack.c.l.b16 %v339
        %v407 = vunpack.c.h.b16 %v339
        %v408 = vunpack.c.l.b16 %v340
        %v409 = vunpack.c.h.b16 %v340
        %v410 = vunpack.c.l.b16 %v341
        %v411 = vunpack.c.h.b16 %v341
        %v412 = vunpack.c.l.b16 %v342
        %v413 = vunpack.c.h.b16 %v342
        %v414 = vunpack.c.l.b16 %v343
        %v415 = vunpack.c.h.b16 %v343
        %v416 = vpack.c.b16 %v386, %v384
        %v417 = vpack.c.b16 %v387, %v385
        %v418 = vpack.c.b16 %v390, %v388
        %v419 = vpack.c.b16 %v391, %v389
        %v420 = vpack.c.b16 %v394, %v392
        %v421 = vpack.c.b16 %v395, %v393
        %v422 = vpack.c.b16 %v398, %v396
        %v423 = vpack.c.b16 %v399, %v397
        %v424 = vpack.c.b16 %v402, %v400
        %v425 = vpack.c.b16 %v403, %v401
        %v426 = vpack.c.b16 %v406, %v404
        %v427 = vpack.c.b16 %v407, %v405
        %v428 = vpack.c.b16 %v410, %v408
        %v429 = vpack.c.b16 %v411, %v409
        %v430 = vpack.c.b16 %v414, %v412
        %v431 = vpack.c.b16 %v415, %v413
        %448 = vmatprep.subr.bf16.mxu0 %v431
        %449 = vmatpush1.bf16.msra.mxu0 %v430
        %450 = vmatprep.subr.bf16.mxu0 %v429
        %451 = vmatpush1.bf16.msra.mxu0 %v428
        %452 = vmatprep.subr.bf16.mxu0 %v427
        %453 = vmatpush1.bf16.msra.mxu0 %v426
        %454 = vmatprep.subr.bf16.mxu0 %v425
        %455 = vmatpush1.bf16.msra.mxu0 %v424
        %456 = vmatprep.subr.bf16.mxu0 %v423
        %457 = vmatpush1.bf16.msra.mxu0 %v422
        %458 = vmatprep.subr.bf16.mxu0 %v421
        %459 = vmatpush1.bf16.msra.mxu0 %v420
        %460 = vmatprep.subr.bf16.mxu0 %v419
        %461 = vmatpush1.bf16.msra.mxu0 %v418
        %462 = vmatprep.subr.bf16.mxu0 %v417
        %463 = vmatpush1.bf16.msra.mxu0 %v416
        %464 = vmatprep.subr.bf16.mxu0 0
        %465 = vmatpush2.bf16.msra.mxu0 0
        %466 = vmatprep.subr.bf16.mxu0 0
        %467 = vmatpush2.bf16.msra.mxu0 0
        %468 = vmatprep.subr.bf16.mxu0 0
        %469 = vmatpush2.bf16.msra.mxu0 0
        %470 = vmatprep.subr.bf16.mxu0 0
        %471 = vmatpush2.bf16.msra.mxu0 0
        %472 = vmatprep.subr.bf16.mxu0 0
        %473 = vmatpush2.bf16.msra.mxu0 0
        %474 = vmatprep.subr.bf16.mxu0 0
        %475 = vmatpush2.bf16.msra.mxu0 0
        %476 = vmatprep.subr.bf16.mxu0 0
        %477 = vmatpush2.bf16.msra.mxu0 0
        %478 = vmatprep.subr.bf16.mxu0 0
        %479 = vmatpush2.bf16.msra.mxu0 0
        %480 = vmatprep.mubr.bf16.mxu0 0
        %481 = vmatmul.mubr.bf16.gmra.mxu0 %v360
        %v482 = vpop.f32.mrf.mxu0
        %v483 = vadd.f32 0.0, %v482
        %v484 = vpop.f32.mrf.mxu0
        %v485 = vadd.f32 0.0, %v484
        %v486 = vpop.f32.mrf.mxu0
        %v487 = vadd.f32 0.0, %v486
        %v488 = vpop.f32.mrf.mxu0
        %v489 = vadd.f32 0.0, %v488
        %490 = vmatprep.mubr.bf16.mxu0 0
        %491 = vmatmul.mubr.bf16.gmra.mxu0 %v361
        %v492 = vpop.f32.mrf.mxu0
        %v493 = vadd.f32 0.0, %v492
        %v494 = vpop.f32.mrf.mxu0
        %v495 = vadd.f32 0.0, %v494
        %v496 = vpop.f32.mrf.mxu0
        %v497 = vadd.f32 0.0, %v496
        %v498 = vpop.f32.mrf.mxu0
        %v499 = vadd.f32 0.0, %v498
        %500 = vmatprep.mubr.bf16.mxu0 0
        %501 = vmatmul.mubr.bf16.gmra.mxu0 %v362
        %v502 = vpop.f32.mrf.mxu0
        %v503 = vadd.f32 0.0, %v502
        %v504 = vpop.f32.mrf.mxu0
        %v505 = vadd.f32 0.0, %v504
        %v506 = vpop.f32.mrf.mxu0
        %v507 = vadd.f32 0.0, %v506
        %v508 = vpop.f32.mrf.mxu0
        %v509 = vadd.f32 0.0, %v508
        %510 = vmatprep.mubr.bf16.mxu0 0
        %511 = vmatmul.mubr.bf16.gmra.mxu0 %v363
        %v512 = vpop.f32.mrf.mxu0
        %v513 = vadd.f32 0.0, %v512
        %v514 = vpop.f32.mrf.mxu0
        %v515 = vadd.f32 0.0, %v514
        %v516 = vpop.f32.mrf.mxu0
        %v517 = vadd.f32 0.0, %v516
        %v518 = vpop.f32.mrf.mxu0
        %v519 = vadd.f32 0.0, %v518
        %520 = vdwg.mxu0
        %v521 = vadd.f32 %v304, %v483
        %v522 = vadd.f32 %v305, %v485
        %v523 = vadd.f32 %v306, %v487
        %v524 = vadd.f32 %v307, %v489
        %v525 = vadd.f32 %v308, %v493
        %v526 = vadd.f32 %v309, %v495
        %v527 = vadd.f32 %v310, %v497
        %v528 = vadd.f32 %v311, %v499
        %v529 = vadd.f32 %v312, %v503
        %v530 = vadd.f32 %v313, %v505
        %v531 = vadd.f32 %v314, %v507
        %v532 = vadd.f32 %v315, %v509
        %v533 = vadd.f32 %v316, %v513
        %v534 = vadd.f32 %v317, %v515
        %v535 = vadd.f32 %v318, %v517
        %v536 = vadd.f32 %v319, %v519
        %537 = vst [vmem:[#allocation2] sm:$0xff] %v521
        %538 = vst [vmem:[#allocation2 + $0x8] sm:$0xff] %v522
        %539 = vst [vmem:[#allocation2 + $0x10] sm:$0xff] %v523
        %540 = vst [vmem:[#allocation2 + $0x18] sm:$0xff] %v524
        %541 = vst [vmem:[#allocation2 + $0x20] sm:$0xff] %v525
        %542 = vst [vmem:[#allocation2 + $0x28] sm:$0xff] %v526
        %543 = vst [vmem:[#allocation2 + $0x30] sm:$0xff] %v527
        %544 = vst [vmem:[#allocation2 + $0x38] sm:$0xff] %v528
        %545 = vst [vmem:[#allocation2 + $0x40] sm:$0xff] %v529
        %546 = vst [vmem:[#allocation2 + $0x48] sm:$0xff] %v530
        %547 = vst [vmem:[#allocation2 + $0x50] sm:$0xff] %v531
        %548 = vst [vmem:[#allocation2 + $0x58] sm:$0xff] %v532
        %549 = vst [vmem:[#allocation2 + $0x60] sm:$0xff] %v533
        %550 = vst [vmem:[#allocation2 + $0x68] sm:$0xff] %v534
        %551 = vst [vmem:[#allocation2 + $0x70] sm:$0xff] %v535
        %552 = vst [vmem:[#allocation2 + $0x78] sm:$0xff] %v536
        %p553 = scmp.eq.s32.totalorder %s30, 4
        // Predicated region
        $region45: #{tpu_custom_call.1} parent=31 // pred_check
          %p554 = pneg %p553
        $region46: #{tpu_custom_call.1} parent=31 // pred_check_branch
          %556 = sbr.rel (%p554) target = $region48
        $region47: #{tpu_custom_call.1} parent=31 // pred_region
          %v557 = vld [vmem:[#allocation2] sm:$0xff]
          %v558 = vld [vmem:[#allocation2 + $0x8] sm:$0xff]
          %v559 = vld [vmem:[#allocation2 + $0x10] sm:$0xff]
          %v560 = vld [vmem:[#allocation2 + $0x18] sm:$0xff]
          %v561 = vld [vmem:[#allocation2 + $0x20] sm:$0xff]
          %v562 = vld [vmem:[#allocation2 + $0x28] sm:$0xff]
          %v563 = vld [vmem:[#allocation2 + $0x30] sm:$0xff]
          %v564 = vld [vmem:[#allocation2 + $0x38] sm:$0xff]
          %v565 = vld [vmem:[#allocation2 + $0x40] sm:$0xff]
          %v566 = vld [vmem:[#allocation2 + $0x48] sm:$0xff]
          %v567 = vld [vmem:[#allocation2 + $0x50] sm:$0xff]
          %v568 = vld [vmem:[#allocation2 + $0x58] sm:$0xff]
          %v569 = vld [vmem:[#allocation2 + $0x60] sm:$0xff]
          %v570 = vld [vmem:[#allocation2 + $0x68] sm:$0xff]
          %v571 = vld [vmem:[#allocation2 + $0x70] sm:$0xff]
          %v572 = vld [vmem:[#allocation2 + $0x78] sm:$0xff]
          %v573 = vld [vmem:[%s279] sm:$0x3]
          %v575 = vlaneseq
          %v576 = vshrl.u32 %v575, 7
          %v577 = vsub.s32 0, %v576
          %v578 = vrot.slane %v573, %v577
          %v579 = vlaneseq
          %v580 = vshrl.u32 %v579, 7
          %v581 = vsub.s32 1, %v580
          %v582 = vrot.slane %v573, %v581
          %v585 = vadd.f32 %v557, %v578
          %v586 = vadd.f32 %v558, %v582
          %v587 = vadd.f32 %v559, %v578
          %v588 = vadd.f32 %v560, %v582
          %v589 = vadd.f32 %v561, %v578
          %v590 = vadd.f32 %v562, %v582
          %v591 = vadd.f32 %v563, %v578
          %v592 = vadd.f32 %v564, %v582
          %v593 = vadd.f32 %v565, %v578
          %v594 = vadd.f32 %v566, %v582
          %v595 = vadd.f32 %v567, %v578
          %v596 = vadd.f32 %v568, %v582
          %v597 = vadd.f32 %v569, %v578
          %v598 = vadd.f32 %v570, %v582
          %v599 = vadd.f32 %v571, %v578
          %v600 = vadd.f32 %v572, %v582
          %v601 = vpack.c.bf16 %v587, %v585
          %v602 = vpack.c.bf16 %v588, %v586
          %v603 = vpack.c.bf16 %v591, %v589
          %v604 = vpack.c.bf16 %v592, %v590
          %v605 = vpack.c.bf16 %v595, %v593
          %v606 = vpack.c.bf16 %v596, %v594
          %v607 = vpack.c.bf16 %v599, %v597
          %v608 = vpack.c.bf16 %v600, %v598
          %v617 = vunpack.c.l.b16 %v601
          %v618 = vunpack.c.l.b16 %v602
          %v619 = vunpack.c.h.b16 %v601
          %v620 = vunpack.c.h.b16 %v602
          %v621 = vunpack.c.l.b16 %v603
          %v622 = vunpack.c.l.b16 %v604
          %v623 = vunpack.c.h.b16 %v603
          %v624 = vunpack.c.h.b16 %v604
          %v625 = vunpack.c.l.b16 %v605
          %v626 = vunpack.c.l.b16 %v606
          %v627 = vunpack.c.h.b16 %v605
          %v628 = vunpack.c.h.b16 %v606
          %v629 = vunpack.c.l.b16 %v607
          %v630 = vunpack.c.l.b16 %v608
          %v631 = vunpack.c.h.b16 %v607
          %v632 = vunpack.c.h.b16 %v608
          %v633 = vpack.c.b16 %v618, %v617
          %v634 = vpack.c.b16 %v620, %v619
          %v635 = vpack.c.b16 %v622, %v621
          %v636 = vpack.c.b16 %v624, %v623
          %v637 = vpack.c.b16 %v626, %v625
          %v638 = vpack.c.b16 %v628, %v627
          %v639 = vpack.c.b16 %v630, %v629
          %v640 = vpack.c.b16 %v632, %v631
          %649 = vst [vmem:[%s272] sm:$0xff] %v633
          %650 = vst [vmem:[%s272 + $0x8] sm:$0xff] %v634
          %651 = vst [vmem:[%s272 + $0x10] sm:$0xff] %v635
          %652 = vst [vmem:[%s272 + $0x18] sm:$0xff] %v636
          %653 = vst [vmem:[%s272 + $0x20] sm:$0xff] %v637
          %654 = vst [vmem:[%s272 + $0x28] sm:$0xff] %v638
          %655 = vst [vmem:[%s272 + $0x30] sm:$0xff] %v639
          %656 = vst [vmem:[%s272 + $0x38] sm:$0xff] %v640
        $region48: #{tpu_custom_call.1} parent=31 // pred_fallthru
          _
        %s657 = sand.u32 %s134, 1
        %s658 = scalar_lea.sflag [#allocation5], %s657
        %s659 = sand.u32 %s134, 1
        %s660 = smul.addr %s659, 64
        %s661 = scalar_lea.vmem [#allocation8], %s660
        // Predicated region
        $region49: #{tpu_custom_call.1} parent=31 // pred_check
          %p662 = pneg %p144
        $region50: #{tpu_custom_call.1} parent=31 // pred_check_branch
          %664 = sbr.rel (%p662) target = $region52
        $region51: #{tpu_custom_call.1} parent=31 // pred_region
          %s665 = smul.u32 8, %s28
          %s666 = smul.u32 2, %s29
          %s668 = ssub.s32 1024, 1024
          %669 = vsyncadd %s658, %s668
          %s670 = smul.addr %s665, 2
          %s671 = sadd.s32 %s666, %s670
          %s672 = smul.addr %s671, 64
          %s673 = scalar_lea.hbm %s3, %s672
          %s674 = sshll.u32 %s661, 4
          %s675 = int_to_ptr.vmem [resolvable:$true] %s674
          %680 = dma.vmem_to_hbm [thread:$0]  %s675, 1024, %s673, %s658, 128, 128, 8
        $region52: #{tpu_custom_call.1} parent=31 // pred_fallthru
          _
      $region32: #{tpu_custom_call.1} parent=5 // pred_fallthru
        _
      %p681 = scmp.le.s32.totalorder 2, %s18
      // Predicated region
      $region53: #{tpu_custom_call.1} parent=5 // pred_check
        %p682 = pneg %p681
      $region54: #{tpu_custom_call.1} parent=5 // pred_check_branch
        %684 = sbr.rel (%p682) target = $region56
      $region55: #{tpu_custom_call.1} parent=5 // pred_region
        %s685 = ssub.s32 %s18, 2
        // Predicated region
        $region57: #{tpu_custom_call.1} parent=55 // pred_check
          %p686 = pneg %p150
        $region58: #{tpu_custom_call.1} parent=55 // pred_check_branch
          %688 = sbr.rel (%p686) target = $region60
        $region59: #{tpu_custom_call.1} parent=55 // pred_region
          %s689 = sand.u32 %s135, 1
          %s690 = scalar_lea.sflag [#allocation5], %s689
          %s691 = sand.u32 %s135, 1
          %s692 = smul.addr %s691, 64
          %s693 = scalar_lea.vmem [#allocation8], %s692
          %694 = dma.done %s690, 1024
        $region60: #{tpu_custom_call.1} parent=55 // pred_fallthru
          _
      $region56: #{tpu_custom_call.1} parent=5 // pred_fallthru
        _
    $region6: #{tpu_custom_call.1} parent=1 // loop_footer
      %s22 = sadd.s32 1, %s18
    $region7: #{tpu_custom_call.1} parent=1 // loop_footer_branch
      %17 = sbr.rel target = $region3
    $region8: #{tpu_custom_call.1} parent=1 // loop_exit
      _
    %695 = vsyncpa [#allocation4], 1
    %s696 = scalar_lea.sflag [#allocation4], 1
    %697 = vsyncpa %s696, 1
    %698 = vsyncpa [#allocation7], 1
    %s699 = scalar_lea.sflag [#allocation7], 1
    %700 = vsyncpa %s699, 1
    %701 = vsyncpa [#allocation5], 1
    %s702 = scalar_lea.sflag [#allocation5], 1
    %703 = vsyncpa %s702, 1

</llo_original>
